<compile_context>
chip_gen: v6e
topology: v6e:2x2x1
jax: 0.10.0
libtpu: 0.0.40
codegen_flags: <defaults>
</compile_context>

<pallas_src>
import functools

import jax
import jax.numpy as jnp
from jax.experimental import pallas as pl
from jax.experimental.pallas import tpu as pltpu

LANE = 128
SUBLANE = 8


def _round_up(v, m):
    return ((v + m - 1) // m) * m


def fused_centrality_kernel(eps_list, f_pad, hid_pad, k_pad,
                            x_ref, a_ref, w_ref, b_ref, out_ref):
    """All GIN layers, statically unrolled in one kernel body.

    Per layer l (eval mode, Dropout = identity, BN folded into W/b):
        h = A @ h + (1 + eps_l) * h        # GIN aggregation + self term
        h = relu(h @ W1_l + b1_l)
        h = relu(h @ W2_l + b2_l)

    Matmuls run with bf16 operands / f32 accumulation on the MXU; all element-wise work
    (self-term FMA, bias add, ReLU) stays in f32 on the VPU.
    """
    a = a_ref[...]                                   # bf16 (n_pad, n_pad), shared by all layers
    h = x_ref[...]                                   # f32  (n_pad, f_pad)
    k_in = f_pad
    for l, eps in enumerate(eps_list):               # eps is a static Python float
        # GIN aggregation (weighted sum over in-neighbors) on the MXU.
        agg = jnp.dot(a, h.astype(jnp.bfloat16), preferred_element_type=jnp.float32)
        # Self term as a cheap VPU FMA instead of a per-layer A + (1+eps)*I adjacency copy.
        z = agg + (1.0 + eps) * h

        # MLP layer 1: Linear (BN folded) -> ReLU.  Static slices into the packed weight slab.
        w1 = w_ref[l, :k_in, :]                      # bf16 (k_in, hid_pad)
        b1 = b_ref[l, 0:1, :]                        # f32  (1, hid_pad)
        h = jnp.maximum(
            jnp.dot(z.astype(jnp.bfloat16), w1, preferred_element_type=jnp.float32) + b1,
            0.0)

        # MLP layer 2: Linear (BN folded) -> ReLU.   Dropout = identity (eval).
        w2 = w_ref[l, k_pad:k_pad + hid_pad, :]      # bf16 (hid_pad, hid_pad)
        b2 = b_ref[l, SUBLANE:SUBLANE + 1, :]        # f32  (1, hid_pad)
        h = jnp.maximum(
            jnp.dot(h.astype(jnp.bfloat16), w2, preferred_element_type=jnp.float32) + b2,
            0.0)
        k_in = hid_pad

    out_ref[...] = h


def make_layer_params(key, in_dim, hidden_dim):
    """Deterministic parameter init for one GINConv layer (synthetic, not a checkpoint)."""
    ks = jax.random.split(key, 10)
    w1 = jax.random.normal(ks[0], (in_dim, hidden_dim), jnp.float32) * 0.2
    b1 = jax.random.normal(ks[1], (1, hidden_dim), jnp.float32) * 0.1
    w2 = jax.random.normal(ks[2], (hidden_dim, hidden_dim), jnp.float32) * 0.2
    b2 = jax.random.normal(ks[3], (1, hidden_dim), jnp.float32) * 0.1

    # Eval-mode BatchNorm1d params / running stats, folded to affine (scale, shift).
    bn_eps = 1e-5
    g1 = 1.0 + 0.1 * jax.random.normal(ks[4], (1, hidden_dim), jnp.float32)
    be1 = 0.1 * jax.random.normal(ks[5], (1, hidden_dim), jnp.float32)
    mu1 = 0.1 * jax.random.normal(ks[6], (1, hidden_dim), jnp.float32)
    var1 = 1.0 + 0.1 * jnp.abs(jax.random.normal(ks[7], (1, hidden_dim), jnp.float32))
    s1 = g1 / jnp.sqrt(var1 + bn_eps)
    t1 = be1 - mu1 * s1

    g2 = 1.0 + 0.1 * jax.random.normal(ks[8], (1, hidden_dim), jnp.float32)
    be2 = 0.1 * jax.random.normal(ks[9], (1, hidden_dim), jnp.float32)
    mu2 = jnp.zeros((1, hidden_dim), jnp.float32)
    var2 = jnp.ones((1, hidden_dim), jnp.float32)
    s2 = g2 / jnp.sqrt(var2 + bn_eps)
    t2 = be2 - mu2 * s2

    # GINConv train_eps=True -> learnable eps; fixed scalar at inference.
    eps = jnp.full((1, 1), 0.1, jnp.float32)
    return dict(eps=eps, w1=w1, b1=b1, s1=s1, t1=t1, w2=w2, b2=b2, s2=s2, t2=t2)


def _fold_bn(p):
    """Fold eval-mode BatchNorm (scale s, shift t) into the preceding Linear."""
    w1 = p["w1"] * p["s1"]
    b1 = p["b1"] * p["s1"] + p["t1"]
    w2 = p["w2"] * p["s2"]
    b2 = p["b2"] * p["s2"] + p["t2"]
    return w1, b1, w2, b2


def centrality_channel(x, edge_index, edge_weight, mask_teams, params_per_layer):
    """Forward pass matching CentralityChannel.forward (eval mode)."""
    n, f_in = x.shape
    num_layers = len(params_per_layer)
    hidden = params_per_layer[0]["w2"].shape[1]

    # Lane-dense padding: n is also the adjacency's source (lane / MXU-K) dimension, so it
    # gets the full 128-multiple treatment (not just 8).
    n_pad = _round_up(n, LANE)
    f_pad = _round_up(f_in, LANE)
    hid_pad = _round_up(hidden, LANE)
    k_pad = max(f_pad, hid_pad)

    # flow="source_to_target", aggr="add": node i sums weighted messages from its source
    # neighbors j -> dense A[dst, src] += w.  Built ONCE (f32 scatter-add), shared by all
    # layers, stored bf16 for the MXU.  Padded rows/cols are all-zero, so padded nodes never
    # contaminate real rows (they only feed themselves through the (1+eps) self term) and the
    # padded output rows are sliced off below.
    src, dst = edge_index[0], edge_index[1]
    adj = jnp.zeros((n_pad, n_pad), jnp.float32).at[dst, src].add(edge_weight)
    adj = adj.astype(jnp.bfloat16)

    x_pad = jnp.zeros((n_pad, f_pad), jnp.float32).at[:n, :f_in].set(x)

    # Pack every layer's (BN-folded) weights into one bf16 slab and biases into one f32 slab
    # -> 4 input refs / DMAs total instead of 1 + 5 * num_layers.
    w_slab = jnp.zeros((num_layers, k_pad + hid_pad, hid_pad), jnp.float32)
    b_slab = jnp.zeros((num_layers, 2 * SUBLANE, hid_pad), jnp.float32)
    eps_list = []
    in_dim = f_in
    for l, p in enumerate(params_per_layer):
        w1, b1, w2, b2 = _fold_bn(p)
        w_slab = w_slab.at[l, :in_dim, :hidden].set(w1)
        w_slab = w_slab.at[l, k_pad:k_pad + hidden, :hidden].set(w2)
        b_slab = b_slab.at[l, 0, :hidden].set(b1[0])
        b_slab = b_slab.at[l, SUBLANE, :hidden].set(b2[0])
        eps_list.append(float(p["eps"].reshape(())))  # static at inference
        in_dim = hidden
    w_slab = w_slab.astype(jnp.bfloat16)

    # Advisory cost estimate + explicit VMEM budget (well under v7x's 64 MiB physical VMEM).
    flops = 0
    k_in = f_pad
    for _ in range(num_layers):
        flops += 2 * n_pad * n_pad * k_in          # aggregation
        flops += 2 * n_pad * k_in * hid_pad        # MLP linear 1
        flops += 2 * n_pad * hid_pad * hid_pad     # MLP linear 2
        k_in = hid_pad
    bytes_accessed = (x_pad.size * 4 + adj.size * 2 + w_slab.size * 2
                      + b_slab.size * 4 + n_pad * hid_pad * 4)

    def vmem():
        return pl.BlockSpec(memory_space=pltpu.MemorySpace.VMEM)

    out_pad = pl.pallas_call(
        functools.partial(fused_centrality_kernel, tuple(eps_list), f_pad, hid_pad, k_pad),
        out_shape=jax.ShapeDtypeStruct((n_pad, hid_pad), jnp.float32),
        in_specs=[vmem(), vmem(), vmem(), vmem()],
        out_specs=vmem(),
        compiler_params=pltpu.CompilerParams(vmem_limit_bytes=32 * 1024 * 1024),
        cost_estimate=pl.CostEstimate(flops=flops, transcendentals=0,
                                      bytes_accessed=bytes_accessed),
    )(x_pad, adj, w_slab, b_slab)

    out = out_pad[:n, :hidden]
    # Fixed-size index gather instead of boolean masking (x[mask_teams] in torch).
    # TODO(synk): under jit, pass precomputed fixed-size team indices (or scalar-prefetch them
    # and gather inside the kernel) instead of deriving them eagerly from the boolean mask.
    team_idx = jnp.flatnonzero(mask_teams)
    return jnp.take(out, team_idx, axis=0)


def centrality_channel_ref(x, edge_index, edge_weight, mask_teams, params_per_layer):
    """Pure-JAX f32 reference with identical semantics (relaxed-tolerance check)."""
    n = x.shape[0]
    src, dst = edge_index[0], edge_index[1]
    adj = jnp.zeros((n, n), jnp.float32).at[dst, src].add(edge_weight)
    h = x
    for p in params_per_layer:
        eps = p["eps"].reshape(())
        h = adj @ h + (1.0 + eps) * h
        h = jnp.maximum((h @ p["w1"] + p["b1"]) * p["s1"] + p["t1"], 0.0)
        h = jnp.maximum((h @ p["w2"] + p["b2"]) * p["s2"] + p["t2"], 0.0)
    return h[mask_teams]


if __name__ == "__main__":
    key = jax.random.PRNGKey(0)
    k_x, k_e, k_w, k_p = jax.random.split(key, 4)

    N = 16            # number of nodes
    INPUT_DIM = 8
    HIDDEN_DIM = 32
    NUM_LAYERS = 2
    E = 40            # number of edges

    x = jax.random.normal(k_x, (N, INPUT_DIM), jnp.float32)
    edge_index = jax.random.randint(k_e, (2, E), 0, N, jnp.int32)
    edge_weight = jax.random.uniform(k_w, (E,), jnp.float32)
    mask_teams = jnp.arange(N) < 4  # first 4 nodes are "teams"

    keys = jax.random.split(k_p, NUM_LAYERS)
    params = []
    in_dim = INPUT_DIM
    for li in range(NUM_LAYERS):
        params.append(make_layer_params(keys[li], in_dim, HIDDEN_DIM))
        in_dim = HIDDEN_DIM

    out = centrality_channel(x, edge_index, edge_weight, mask_teams, params)
    jax.block_until_ready(out)
    assert out.shape == (4, HIDDEN_DIM), out.shape

    # bf16 MXU operands lose ~3 decimal digits; validate vs f32 reference with relaxed tol.
    ref = centrality_channel_ref(x, edge_index, edge_weight, mask_teams, params)
    max_err = float(jnp.max(jnp.abs(out - ref)))
    assert jnp.allclose(out, ref, rtol=1e-1, atol=1e-1), max_err

    print("KERNEL_OK")
</pallas_src>

<mosaic_0001>
module attributes {stable_mosaic.version = 11 : i64} {
  func.func @fused_centrality_kernel(%arg0: memref<128x128xf32, #tpu.memory_space<vmem>>, %arg1: memref<128x128xbf16, #tpu.memory_space<vmem>>, %arg2: memref<2x256x128xbf16, #tpu.memory_space<vmem>>, %arg3: memref<2x16x128xf32, #tpu.memory_space<vmem>>, %arg4: memref<128x128xf32, #tpu.memory_space<vmem>>) attributes {dimension_semantics = [], scalar_prefetch = 0 : i64, scratch_operands = 0 : i64, tpu.core_type = #tpu.core_type<tc>} {
    %c0 = arith.constant 0 : index
    %c0_0 = arith.constant 0 : index
    %0 = vector.load %arg1[%c0, %c0_0] : memref<128x128xbf16, #tpu.memory_space<vmem>>, vector<128x128xbf16>
    %c0_1 = arith.constant 0 : index
    %c0_2 = arith.constant 0 : index
    %1 = vector.load %arg0[%c0_1, %c0_2] : memref<128x128xf32, #tpu.memory_space<vmem>>, vector<128x128xf32>
    %2 = arith.truncf %1 : vector<128x128xf32> to vector<128x128xbf16>
    %cst = arith.constant dense<0.000000e+00> : vector<128x128xf32>
    %3 = tpu.matmul %0, %2, %cst {dimension_numbers = #tpu.dot_dimension_numbers<[1], [0], [0], [1], [0, 0, 1, 1], [], []>} : vector<128x128xbf16>, vector<128x128xbf16>, vector<128x128xf32> -> vector<128x128xf32>
    %cst_3 = arith.constant 1.100000e+00 : f32
    %4 = vector.broadcast %cst_3 : f32 to vector<128x128xf32>
    %5 = arith.mulf %4, %1 : vector<128x128xf32>
    %6 = arith.addf %3, %5 : vector<128x128xf32>
    %c0_4 = arith.constant 0 : index
    %c0_5 = arith.constant 0 : index
    %c0_6 = arith.constant 0 : index
    %7 = vector.load %arg2[%c0_4, %c0_5, %c0_6] : memref<2x256x128xbf16, #tpu.memory_space<vmem>>, vector<1x128x128xbf16>
    %8 = vector.shape_cast %7 : vector<1x128x128xbf16> to vector<128x128xbf16>
    %c0_7 = arith.constant 0 : index
    %c0_8 = arith.constant 0 : index
    %c0_9 = arith.constant 0 : index
    %9 = vector.load %arg3[%c0_7, %c0_8, %c0_9] : memref<2x16x128xf32, #tpu.memory_space<vmem>>, vector<1x1x128xf32>
    %10 = vector.shape_cast %9 : vector<1x1x128xf32> to vector<1x128xf32>
    %11 = arith.truncf %6 : vector<128x128xf32> to vector<128x128xbf16>
    %cst_10 = arith.constant dense<0.000000e+00> : vector<128x128xf32>
    %12 = tpu.matmul %11, %8, %cst_10 {dimension_numbers = #tpu.dot_dimension_numbers<[1], [0], [0], [1], [0, 0, 1, 1], [], []>} : vector<128x128xbf16>, vector<128x128xbf16>, vector<128x128xf32> -> vector<128x128xf32>
    %13 = vector.broadcast %10 : vector<1x128xf32> to vector<128x128xf32>
    %14 = arith.addf %12, %13 : vector<128x128xf32>
    %cst_11 = arith.constant 0.000000e+00 : f32
    %15 = vector.broadcast %cst_11 : f32 to vector<128x128xf32>
    %16 = arith.maximumf %14, %15 : vector<128x128xf32>
    %c0_12 = arith.constant 0 : index
    %c128 = arith.constant 128 : index
    %c0_13 = arith.constant 0 : index
    %17 = vector.load %arg2[%c0_12, %c128, %c0_13] : memref<2x256x128xbf16, #tpu.memory_space<vmem>>, vector<1x128x128xbf16>
    %18 = vector.shape_cast %17 : vector<1x128x128xbf16> to vector<128x128xbf16>
    %c0_14 = arith.constant 0 : index
    %c8 = arith.constant 8 : index
    %c0_15 = arith.constant 0 : index
    %19 = vector.load %arg3[%c0_14, %c8, %c0_15] : memref<2x16x128xf32, #tpu.memory_space<vmem>>, vector<1x1x128xf32>
    %20 = vector.shape_cast %19 : vector<1x1x128xf32> to vector<1x128xf32>
    %21 = arith.truncf %16 : vector<128x128xf32> to vector<128x128xbf16>
    %cst_16 = arith.constant dense<0.000000e+00> : vector<128x128xf32>
    %22 = tpu.matmul %21, %18, %cst_16 {dimension_numbers = #tpu.dot_dimension_numbers<[1], [0], [0], [1], [0, 0, 1, 1], [], []>} : vector<128x128xbf16>, vector<128x128xbf16>, vector<128x128xf32> -> vector<128x128xf32>
    %23 = vector.broadcast %20 : vector<1x128xf32> to vector<128x128xf32>
    %24 = arith.addf %22, %23 : vector<128x128xf32>
    %cst_17 = arith.constant 0.000000e+00 : f32
    %25 = vector.broadcast %cst_17 : f32 to vector<128x128xf32>
    %26 = arith.maximumf %24, %25 : vector<128x128xf32>
    %27 = arith.truncf %26 : vector<128x128xf32> to vector<128x128xbf16>
    %cst_18 = arith.constant dense<0.000000e+00> : vector<128x128xf32>
    %28 = tpu.matmul %0, %27, %cst_18 {dimension_numbers = #tpu.dot_dimension_numbers<[1], [0], [0], [1], [0, 0, 1, 1], [], []>} : vector<128x128xbf16>, vector<128x128xbf16>, vector<128x128xf32> -> vector<128x128xf32>
    %cst_19 = arith.constant 1.100000e+00 : f32
    %29 = vector.broadcast %cst_19 : f32 to vector<128x128xf32>
    %30 = arith.mulf %29, %26 : vector<128x128xf32>
    %31 = arith.addf %28, %30 : vector<128x128xf32>
    %c1 = arith.constant 1 : index
    %c0_20 = arith.constant 0 : index
    %c0_21 = arith.constant 0 : index
    %32 = vector.load %arg2[%c1, %c0_20, %c0_21] : memref<2x256x128xbf16, #tpu.memory_space<vmem>>, vector<1x128x128xbf16>
    %33 = vector.shape_cast %32 : vector<1x128x128xbf16> to vector<128x128xbf16>
    %c1_22 = arith.constant 1 : index
    %c0_23 = arith.constant 0 : index
    %c0_24 = arith.constant 0 : index
    %34 = vector.load %arg3[%c1_22, %c0_23, %c0_24] : memref<2x16x128xf32, #tpu.memory_space<vmem>>, vector<1x1x128xf32>
    %35 = vector.shape_cast %34 : vector<1x1x128xf32> to vector<1x128xf32>
    %36 = arith.truncf %31 : vector<128x128xf32> to vector<128x128xbf16>
    %cst_25 = arith.constant dense<0.000000e+00> : vector<128x128xf32>
    %37 = tpu.matmul %36, %33, %cst_25 {dimension_numbers = #tpu.dot_dimension_numbers<[1], [0], [0], [1], [0, 0, 1, 1], [], []>} : vector<128x128xbf16>, vector<128x128xbf16>, vector<128x128xf32> -> vector<128x128xf32>
    %38 = vector.broadcast %35 : vector<1x128xf32> to vector<128x128xf32>
    %39 = arith.addf %37, %38 : vector<128x128xf32>
    %cst_26 = arith.constant 0.000000e+00 : f32
    %40 = vector.broadcast %cst_26 : f32 to vector<128x128xf32>
    %41 = arith.maximumf %39, %40 : vector<128x128xf32>
    %c1_27 = arith.constant 1 : index
    %c128_28 = arith.constant 128 : index
    %c0_29 = arith.constant 0 : index
    %42 = vector.load %arg2[%c1_27, %c128_28, %c0_29] : memref<2x256x128xbf16, #tpu.memory_space<vmem>>, vector<1x128x128xbf16>
    %43 = vector.shape_cast %42 : vector<1x128x128xbf16> to vector<128x128xbf16>
    %c1_30 = arith.constant 1 : index
    %c8_31 = arith.constant 8 : index
    %c0_32 = arith.constant 0 : index
    %44 = vector.load %arg3[%c1_30, %c8_31, %c0_32] : memref<2x16x128xf32, #tpu.memory_space<vmem>>, vector<1x1x128xf32>
    %45 = vector.shape_cast %44 : vector<1x1x128xf32> to vector<1x128xf32>
    %46 = arith.truncf %41 : vector<128x128xf32> to vector<128x128xbf16>
    %cst_33 = arith.constant dense<0.000000e+00> : vector<128x128xf32>
    %47 = tpu.matmul %46, %43, %cst_33 {dimension_numbers = #tpu.dot_dimension_numbers<[1], [0], [0], [1], [0, 0, 1, 1], [], []>} : vector<128x128xbf16>, vector<128x128xbf16>, vector<128x128xf32> -> vector<128x128xf32>
    %48 = vector.broadcast %45 : vector<1x128xf32> to vector<128x128xf32>
    %49 = arith.addf %47, %48 : vector<128x128xf32>
    %cst_34 = arith.constant 0.000000e+00 : f32
    %50 = vector.broadcast %cst_34 : f32 to vector<128x128xf32>
    %51 = arith.maximumf %49, %50 : vector<128x128xf32>
    %c0_35 = arith.constant 0 : index
    %c0_36 = arith.constant 0 : index
    %52 = vector.load %arg4[%c0_35, %c0_36] : memref<128x128xf32, #tpu.memory_space<vmem>>, vector<128x128xf32>
    tpu.vector_store %arg4[%c0_35, %c0_36], %51 {strides = array<i32>} : memref<128x128xf32, #tpu.memory_space<vmem>>, vector<128x128xf32>,
    return
  }
}

</mosaic_0001>

<llo_original>
// kernel: tpu_custom_call.1
$region0: #{tpu_custom_call.1}
  #allocation0 [shape = 'u32[]', space=smem, size = 0x4, offset = 0x4, fixed_abs, tag = 'smem constant byte address 0x4 - core index']
  #allocation1 [shape = 'u32[144,128]{1,0:T(1,128)}', space=vmem, size = 0x12000, scoped, tag = 'internal scratch']
  %s0 = inlined_call_operand.hbm [shape: f32[128,128], index: 0, kind: input, shape index: {}]
  %s1 = inlined_call_operand.hbm [shape: bf16[128,128], index: 1, kind: input, shape index: {}]
  %s2 = inlined_call_operand.hbm [shape: bf16[2,256,128], index: 2, kind: input, shape index: {}]
  %s3 = inlined_call_operand.hbm [shape: f32[2,16,128], index: 3, kind: input, shape index: {}]
  %s4 = inlined_call_operand.hbm [shape: f32[128,128], index: 4, kind: output, shape index: {}]
  %s5 = sld [smem:[#allocation0]]
  $region42: #{tpu_custom_call.1} parent=0
    _
  %s7 = ssub.s32 1, %s5
  %s8 = scalar_select 0, %s7, %s5
  $region1: #{tpu_custom_call.1} parent=0
    #allocation2 [shape = 'u8[65536]{0}', space=vmem, size = 0x10000, scoped, tag = 'input window, operand 0, single buffered']
    #allocation3 [shape = 's32[1]{0}', space=sflag, size = 0x4, scoped, tag = 'scoped memory for tpu_custom_call.1']
    #allocation4 [shape = 's32[1]{0}', space=sflag, size = 0x4, scoped, tag = 'scoped memory for tpu_custom_call.1']
    #allocation5 [shape = 'u8[32768]{0}', space=vmem, size = 0x8000, scoped, tag = 'input window, operand 1, single buffered']
    #allocation6 [shape = 's32[1]{0}', space=sflag, size = 0x4, scoped, tag = 'scoped memory for tpu_custom_call.1']
    #allocation7 [shape = 'u8[131072]{0}', space=vmem, size = 0x20000, scoped, tag = 'input window, operand 2, single buffered']
    #allocation8 [shape = 'u8[16384]{0}', space=vmem, size = 0x4000, scoped, tag = 'input window, operand 3, single buffered']
    #allocation9 [shape = 's32[1]{0}', space=sflag, size = 0x4, scoped, tag = 'scoped memory for tpu_custom_call.1']
    #allocation10 [shape = 'u8[65536]{0}', space=vmem, size = 0x10000, scoped, tag = 'output window, operand 0, single buffered']
    %9 = vsyncpa [#allocation3], 0
    %10 = vsyncpa [#allocation6], 0
    %11 = vsyncpa [#allocation9], 0
    %12 = vsyncpa [#allocation4], 0
    // Predicated region
    $region2: #{tpu_custom_call.1} parent=1 // pred_check
      _
    $region3: #{tpu_custom_call.1} parent=1 // pred_check_branch
      %14 = sbr.rel (0) target = $region5
    $region4: #{tpu_custom_call.1} parent=1 // pred_region
      %s16 = ssub.s32 2048, 2048
      %17 = vsyncadd [#allocation3], %s16
      %s18 = sshll.u32 [#allocation2], 4
      %s19 = int_to_ptr.vmem [resolvable:$true] %s18
      %24 = dma.hbm_to_vmem [thread:$0]  %s0, 2048, %s19, [#allocation3], 128, 128, 8
    $region5: #{tpu_custom_call.1} parent=1 // pred_fallthru
      _
    // Predicated region
    $region6: #{tpu_custom_call.1} parent=1 // pred_check
      _
    $region7: #{tpu_custom_call.1} parent=1 // pred_check_branch
      %26 = sbr.rel (0) target = $region9
    $region8: #{tpu_custom_call.1} parent=1 // pred_region
      %s28 = ssub.s32 1024, 1024
      %29 = vsyncadd [#allocation6], %s28
      %s30 = sshll.u32 [#allocation5], 4
      %s31 = int_to_ptr.vmem [resolvable:$true] %s30
      %36 = dma.hbm_to_vmem [thread:$0]  %s1, 1024, %s31, [#allocation6], 64, 64, 4
    $region9: #{tpu_custom_call.1} parent=1 // pred_fallthru
      _
    // Predicated region
    $region10: #{tpu_custom_call.1} parent=1 // pred_check
      _
    $region11: #{tpu_custom_call.1} parent=1 // pred_check_branch
      %38 = sbr.rel (0) target = $region13
    $region12: #{tpu_custom_call.1} parent=1 // pred_region
      %s40 = ssub.s32 4096, 4096
      %41 = vsyncadd [#allocation6], %s40
      %s42 = sshll.u32 [#allocation7], 4
      %s43 = int_to_ptr.vmem [resolvable:$true] %s42
      %48 = dma.hbm_to_vmem [thread:$0]  %s2, 4096, %s43, [#allocation6], 64, 64, 4
    $region13: #{tpu_custom_call.1} parent=1 // pred_fallthru
      _
    // Predicated region
    $region14: #{tpu_custom_call.1} parent=1 // pred_check
      _
    $region15: #{tpu_custom_call.1} parent=1 // pred_check_branch
      %50 = sbr.rel (0) target = $region17
    $region16: #{tpu_custom_call.1} parent=1 // pred_region
      %s52 = ssub.s32 512, 512
      %53 = vsyncadd [#allocation9], %s52
      %s54 = sshll.u32 [#allocation8], 4
      %s55 = int_to_ptr.vmem [resolvable:$true] %s54
      %60 = dma.hbm_to_vmem [thread:$0]  %s3, 512, %s55, [#allocation9], 128, 128, 8
    $region17: #{tpu_custom_call.1} parent=1 // pred_fallthru
      _
    // Predicated region
    $region18: #{tpu_custom_call.1} parent=1 // pred_check
      _
    $region19: #{tpu_custom_call.1} parent=1 // pred_check_branch
      %62 = sbr.rel (0) target = $region21
    $region20: #{tpu_custom_call.1} parent=1 // pred_region
      %63 = dma.done [#allocation3], 2048
    $region21: #{tpu_custom_call.1} parent=1 // pred_fallthru
      _
    // Predicated region
    $region22: #{tpu_custom_call.1} parent=1 // pred_check
      _
    $region23: #{tpu_custom_call.1} parent=1 // pred_check_branch
      %65 = sbr.rel (0) target = $region25
    $region24: #{tpu_custom_call.1} parent=1 // pred_region
      %66 = dma.done [#allocation6], 1024
    $region25: #{tpu_custom_call.1} parent=1 // pred_fallthru
      _
    // Predicated region
    $region26: #{tpu_custom_call.1} parent=1 // pred_check
      _
    $region27: #{tpu_custom_call.1} parent=1 // pred_check_branch
      %68 = sbr.rel (0) target = $region29
    $region28: #{tpu_custom_call.1} parent=1 // pred_region
      %69 = dma.done [#allocation6], 4096
    $region29: #{tpu_custom_call.1} parent=1 // pred_fallthru
      _
    // Predicated region
    $region30: #{tpu_custom_call.1} parent=1 // pred_check
      _
    $region31: #{tpu_custom_call.1} parent=1 // pred_check_branch
      %71 = sbr.rel (0) target = $region33
    $region32: #{tpu_custom_call.1} parent=1 // pred_region
      %72 = dma.done [#allocation9], 512
    $region33: #{tpu_custom_call.1} parent=1 // pred_fallthru
      _
    %v74 = vld [vmem:[#allocation5] sm:$0xf]
    %v75 = vld [vmem:[#allocation5 + $0x4] sm:$0xf]
    %v76 = vld [vmem:[#allocation5 + $0x8] sm:$0xf]
    %v77 = vld [vmem:[#allocation5 + $0xc] sm:$0xf]
    %v78 = vld [vmem:[#allocation5 + $0x10] sm:$0xf]
    %v79 = vld [vmem:[#allocation5 + $0x14] sm:$0xf]
    %v80 = vld [vmem:[#allocation5 + $0x18] sm:$0xf]
    %v81 = vld [vmem:[#allocation5 + $0x1c] sm:$0xf]
    %v82 = vld [vmem:[#allocation5 + $0x20] sm:$0xf]
    %v83 = vld [vmem:[#allocation5 + $0x24] sm:$0xf]
    %v84 = vld [vmem:[#allocation5 + $0x28] sm:$0xf]
    %v85 = vld [vmem:[#allocation5 + $0x2c] sm:$0xf]
    %v86 = vld [vmem:[#allocation5 + $0x30] sm:$0xf]
    %v87 = vld [vmem:[#allocation5 + $0x34] sm:$0xf]
    %v88 = vld [vmem:[#allocation5 + $0x38] sm:$0xf]
    %v89 = vld [vmem:[#allocation5 + $0x3c] sm:$0xf]
    %v90 = vld [vmem:[#allocation2] sm:$0xff]
    %v91 = vld [vmem:[#allocation2 + $0x8] sm:$0xff]
    %v92 = vld [vmem:[#allocation2 + $0x10] sm:$0xff]
    %v93 = vld [vmem:[#allocation2 + $0x18] sm:$0xff]
    %v94 = vld [vmem:[#allocation2 + $0x20] sm:$0xff]
    %v95 = vld [vmem:[#allocation2 + $0x28] sm:$0xff]
    %v96 = vld [vmem:[#allocation2 + $0x30] sm:$0xff]
    %v97 = vld [vmem:[#allocation2 + $0x38] sm:$0xff]
    %v98 = vld [vmem:[#allocation2 + $0x40] sm:$0xff]
    %v99 = vld [vmem:[#allocation2 + $0x48] sm:$0xff]
    %v100 = vld [vmem:[#allocation2 + $0x50] sm:$0xff]
    %v101 = vld [vmem:[#allocation2 + $0x58] sm:$0xff]
    %v102 = vld [vmem:[#allocation2 + $0x60] sm:$0xff]
    %v103 = vld [vmem:[#allocation2 + $0x68] sm:$0xff]
    %v104 = vld [vmem:[#allocation2 + $0x70] sm:$0xff]
    %v105 = vld [vmem:[#allocation2 + $0x78] sm:$0xff]
    %v106 = vpack.c.bf16 %v91, %v90
    %v107 = vpack.c.bf16 %v93, %v92
    %v108 = vpack.c.bf16 %v95, %v94
    %v109 = vpack.c.bf16 %v97, %v96
    %v110 = vpack.c.bf16 %v99, %v98
    %v111 = vpack.c.bf16 %v101, %v100
    %v112 = vpack.c.bf16 %v103, %v102
    %v113 = vpack.c.bf16 %v105, %v104
    %v114 = vmul.f32 %v90, 1.1
    %v115 = vmul.f32 %v91, 1.1
    %v116 = vmul.f32 %v92, 1.1
    %v117 = vmul.f32 %v93, 1.1
    %v118 = vmul.f32 %v94, 1.1
    %v119 = vmul.f32 %v95, 1.1
    %v120 = vmul.f32 %v96, 1.1
    %v121 = vmul.f32 %v97, 1.1
    %v122 = vmul.f32 %v98, 1.1
    %v123 = vmul.f32 %v99, 1.1
    %v124 = vmul.f32 %v100, 1.1
    %v125 = vmul.f32 %v101, 1.1
    %v126 = vmul.f32 %v102, 1.1
    %v127 = vmul.f32 %v103, 1.1
    %v128 = vmul.f32 %v104, 1.1
    %v129 = vmul.f32 %v105, 1.1
    %v146 = vunpack.c.l.b16 %v74
    %v147 = vunpack.c.l.b16 %v75
    %v148 = vunpack.c.l.b16 %v76
    %v149 = vunpack.c.l.b16 %v77
    %v150 = vunpack.c.l.b16 %v78
    %v151 = vunpack.c.l.b16 %v79
    %v152 = vunpack.c.l.b16 %v80
    %v153 = vunpack.c.l.b16 %v81
    %v154 = vunpack.c.l.b16 %v82
    %v155 = vunpack.c.l.b16 %v83
    %v156 = vunpack.c.l.b16 %v84
    %v157 = vunpack.c.l.b16 %v85
    %v158 = vunpack.c.l.b16 %v86
    %v159 = vunpack.c.l.b16 %v87
    %v160 = vunpack.c.l.b16 %v88
    %v161 = vunpack.c.l.b16 %v89
    %v162 = vpack.c.b16 %v147, %v146
    %v163 = vpack.c.b16 %v149, %v148
    %v164 = vpack.c.b16 %v151, %v150
    %v165 = vpack.c.b16 %v153, %v152
    %v166 = vpack.c.b16 %v155, %v154
    %v167 = vpack.c.b16 %v157, %v156
    %v168 = vpack.c.b16 %v159, %v158
    %v169 = vpack.c.b16 %v161, %v160
    %178 = vmatprep.subr.bf16.mxu0 0
    %179 = vmatpush1.bf16.msra.mxu0 %v113
    %180 = vmatprep.subr.bf16.mxu0 0
    %181 = vmatpush1.bf16.msra.mxu0 %v112
    %182 = vmatprep.subr.bf16.mxu0 0
    %183 = vmatpush1.bf16.msra.mxu0 %v111
    %184 = vmatprep.subr.bf16.mxu0 0
    %185 = vmatpush1.bf16.msra.mxu0 %v110
    %186 = vmatprep.subr.bf16.mxu0 0
    %187 = vmatpush1.bf16.msra.mxu0 %v109
    %188 = vmatprep.subr.bf16.mxu0 0
    %189 = vmatpush1.bf16.msra.mxu0 %v108
    %190 = vmatprep.subr.bf16.mxu0 0
    %191 = vmatpush1.bf16.msra.mxu0 %v107
    %192 = vmatprep.subr.bf16.mxu0 0
    %193 = vmatpush1.bf16.msra.mxu0 %v106
    %194 = vmatprep.subr.bf16.mxu0 0
    %195 = vmatpush2.bf16.msra.mxu0 0
    %196 = vmatprep.subr.bf16.mxu0 0
    %197 = vmatpush2.bf16.msra.mxu0 0
    %198 = vmatprep.subr.bf16.mxu0 0
    %199 = vmatpush2.bf16.msra.mxu0 0
    %200 = vmatprep.subr.bf16.mxu0 0
    %201 = vmatpush2.bf16.msra.mxu0 0
    %202 = vmatprep.subr.bf16.mxu0 0
    %203 = vmatpush2.bf16.msra.mxu0 0
    %204 = vmatprep.subr.bf16.mxu0 0
    %205 = vmatpush2.bf16.msra.mxu0 0
    %206 = vmatprep.subr.bf16.mxu0 0
    %207 = vmatpush2.bf16.msra.mxu0 0
    %208 = vmatprep.subr.bf16.mxu0 0
    %209 = vmatpush2.bf16.msra.mxu0 0
    %210 = vmatprep.mubr.bf16.mxu0 0
    %211 = vmatmul.mubr.bf16.gmra.mxu0 %v162
    %v212 = vpop.f32.mrf.mxu0
    %v213 = vadd.f32 %v114, %v212
    %v214 = vpop.f32.mrf.mxu0
    %v215 = vpop.f32.mrf.mxu0
    %v216 = vadd.f32 %v115, %v215
    %v217 = vpop.f32.mrf.mxu0
    %218 = vmatprep.mubr.bf16.mxu0 0
    %219 = vmatmul.mubr.bf16.gmra.mxu0 %v163
    %v220 = vpop.f32.mrf.mxu0
    %v221 = vadd.f32 %v116, %v220
    %v222 = vpop.f32.mrf.mxu0
    %v223 = vpop.f32.mrf.mxu0
    %v224 = vadd.f32 %v117, %v223
    %v225 = vpop.f32.mrf.mxu0
    %226 = vmatprep.mubr.bf16.mxu0 0
    %227 = vmatmul.mubr.bf16.gmra.mxu0 %v164
    %v228 = vpop.f32.mrf.mxu0
    %v229 = vadd.f32 %v118, %v228
    %v230 = vpop.f32.mrf.mxu0
    %v231 = vpop.f32.mrf.mxu0
    %v232 = vadd.f32 %v119, %v231
    %v233 = vpop.f32.mrf.mxu0
    %234 = vmatprep.mubr.bf16.mxu0 0
    %235 = vmatmul.mubr.bf16.gmra.mxu0 %v165
    %v236 = vpop.f32.mrf.mxu0
    %v237 = vadd.f32 %v120, %v236
    %v238 = vpop.f32.mrf.mxu0
    %v239 = vpop.f32.mrf.mxu0
    %v240 = vadd.f32 %v121, %v239
    %v241 = vpop.f32.mrf.mxu0
    %242 = vmatprep.mubr.bf16.mxu0 0
    %243 = vmatmul.mubr.bf16.gmra.mxu0 %v166
    %v244 = vpop.f32.mrf.mxu0
    %v245 = vadd.f32 %v122, %v244
    %v246 = vpop.f32.mrf.mxu0
    %v247 = vpop.f32.mrf.mxu0
    %v248 = vadd.f32 %v123, %v247
    %v249 = vpop.f32.mrf.mxu0
    %250 = vmatprep.mubr.bf16.mxu0 0
    %251 = vmatmul.mubr.bf16.gmra.mxu0 %v167
    %v252 = vpop.f32.mrf.mxu0
    %v253 = vadd.f32 %v124, %v252
    %v254 = vpop.f32.mrf.mxu0
    %v255 = vpop.f32.mrf.mxu0
    %v256 = vadd.f32 %v125, %v255
    %v257 = vpop.f32.mrf.mxu0
    %258 = vmatprep.mubr.bf16.mxu0 0
    %259 = vmatmul.mubr.bf16.gmra.mxu0 %v168
    %v260 = vpop.f32.mrf.mxu0
    %v261 = vadd.f32 %v126, %v260
    %v262 = vpop.f32.mrf.mxu0
    %v263 = vpop.f32.mrf.mxu0
    %v264 = vadd.f32 %v127, %v263
    %v265 = vpop.f32.mrf.mxu0
    %266 = vmatprep.mubr.bf16.mxu0 0
    %267 = vmatmul.mubr.bf16.gmra.mxu0 %v169
    %v268 = vpop.f32.mrf.mxu0
    %v269 = vadd.f32 %v128, %v268
    %v270 = vpop.f32.mrf.mxu0
    %v271 = vpop.f32.mrf.mxu0
    %v272 = vadd.f32 %v129, %v271
    %v273 = vpop.f32.mrf.mxu0
    %274 = vdwg.mxu0
    %v275 = vld [vmem:[#allocation7] sm:$0xf]
    %v276 = vld [vmem:[#allocation7 + $0x4] sm:$0xf]
    %v277 = vld [vmem:[#allocation7 + $0x8] sm:$0xf]
    %v278 = vld [vmem:[#allocation7 + $0xc] sm:$0xf]
    %v279 = vld [vmem:[#allocation7 + $0x10] sm:$0xf]
    %v280 = vld [vmem:[#allocation7 + $0x14] sm:$0xf]
    %v281 = vld [vmem:[#allocation7 + $0x18] sm:$0xf]
    %v282 = vld [vmem:[#allocation7 + $0x1c] sm:$0xf]
    %v283 = vld [vmem:[#allocation7 + $0x20] sm:$0xf]
    %v284 = vld [vmem:[#allocation7 + $0x24] sm:$0xf]
    %v285 = vld [vmem:[#allocation7 + $0x28] sm:$0xf]
    %v286 = vld [vmem:[#allocation7 + $0x2c] sm:$0xf]
    %v287 = vld [vmem:[#allocation7 + $0x30] sm:$0xf]
    %v288 = vld [vmem:[#allocation7 + $0x34] sm:$0xf]
    %v289 = vld [vmem:[#allocation7 + $0x38] sm:$0xf]
    %v290 = vld [vmem:[#allocation7 + $0x3c] sm:$0xf]
    %v291 = vld [vmem:[#allocation8] sm:$0x1]
    %v292 = vpack.c.bf16 %v216, %v213
    %v293 = vpack.c.bf16 %v224, %v221
    %v294 = vpack.c.bf16 %v232, %v229
    %v295 = vpack.c.bf16 %v240, %v237
    %v296 = vpack.c.bf16 %v248, %v245
    %v297 = vpack.c.bf16 %v256, %v253
    %v298 = vpack.c.bf16 %v264, %v261
    %v299 = vpack.c.bf16 %v272, %v269
    %v300 = vlaneseq
    %v301 = vshrl.u32 %v300, 7
    %v302 = vsub.s32 0, %v301
    %v303 = vrot.slane %v291, %v302
    %v320 = vunpack.c.l.b16 %v275
    %v321 = vunpack.c.l.b16 %v276
    %v322 = vunpack.c.l.b16 %v277
    %v323 = vunpack.c.l.b16 %v278
    %v324 = vunpack.c.l.b16 %v279
    %v325 = vunpack.c.l.b16 %v280
    %v326 = vunpack.c.l.b16 %v281
    %v327 = vunpack.c.l.b16 %v282
    %v328 = vunpack.c.l.b16 %v283
    %v329 = vunpack.c.l.b16 %v284
    %v330 = vunpack.c.l.b16 %v285
    %v331 = vunpack.c.l.b16 %v286
    %v332 = vunpack.c.l.b16 %v287
    %v333 = vunpack.c.l.b16 %v288
    %v334 = vunpack.c.l.b16 %v289
    %v335 = vunpack.c.l.b16 %v290
    %v336 = vpack.c.b16 %v321, %v320
    %v337 = vpack.c.b16 %v323, %v322
    %v338 = vpack.c.b16 %v325, %v324
    %v339 = vpack.c.b16 %v327, %v326
    %v340 = vpack.c.b16 %v329, %v328
    %v341 = vpack.c.b16 %v331, %v330
    %v342 = vpack.c.b16 %v333, %v332
    %v343 = vpack.c.b16 %v335, %v334
    %352 = vmatprep.subr.bf16.mxu0 0
    %353 = vmatpush1.bf16.msra.mxu0 %v343
    %354 = vmatprep.subr.bf16.mxu0 0
    %355 = vmatpush1.bf16.msra.mxu0 %v342
    %356 = vmatprep.subr.bf16.mxu0 0
    %357 = vmatpush1.bf16.msra.mxu0 %v341
    %358 = vmatprep.subr.bf16.mxu0 0
    %359 = vmatpush1.bf16.msra.mxu0 %v340
    %360 = vmatprep.subr.bf16.mxu0 0
    %361 = vmatpush1.bf16.msra.mxu0 %v339
    %362 = vmatprep.subr.bf16.mxu0 0
    %363 = vmatpush1.bf16.msra.mxu0 %v338
    %364 = vmatprep.subr.bf16.mxu0 0
    %365 = vmatpush1.bf16.msra.mxu0 %v337
    %366 = vmatprep.subr.bf16.mxu0 0
    %367 = vmatpush1.bf16.msra.mxu0 %v336
    %368 = vmatprep.subr.bf16.mxu0 0
    %369 = vmatpush2.bf16.msra.mxu0 0
    %370 = vmatprep.subr.bf16.mxu0 0
    %371 = vmatpush2.bf16.msra.mxu0 0
    %372 = vmatprep.subr.bf16.mxu0 0
    %373 = vmatpush2.bf16.msra.mxu0 0
    %374 = vmatprep.subr.bf16.mxu0 0
    %375 = vmatpush2.bf16.msra.mxu0 0
    %376 = vmatprep.subr.bf16.mxu0 0
    %377 = vmatpush2.bf16.msra.mxu0 0
    %378 = vmatprep.subr.bf16.mxu0 0
    %379 = vmatpush2.bf16.msra.mxu0 0
    %380 = vmatprep.subr.bf16.mxu0 0
    %381 = vmatpush2.bf16.msra.mxu0 0
    %382 = vmatprep.subr.bf16.mxu0 0
    %383 = vmatpush2.bf16.msra.mxu0 0
    %384 = vmatprep.mubr.bf16.mxu0 0
    %385 = vmatmul.mubr.bf16.gmra.mxu0 %v292
    %v386 = vpop.f32.mrf.mxu0
    %v387 = vadd.f32 %v303, %v386
    %v388 = vpop.f32.mrf.mxu0
    %v389 = vpop.f32.mrf.mxu0
    %v390 = vadd.f32 %v303, %v389
    %v391 = vpop.f32.mrf.mxu0
    %392 = vmatprep.mubr.bf16.mxu0 0
    %393 = vmatmul.mubr.bf16.gmra.mxu0 %v293
    %v394 = vpop.f32.mrf.mxu0
    %v395 = vadd.f32 %v303, %v394
    %v396 = vpop.f32.mrf.mxu0
    %v397 = vpop.f32.mrf.mxu0
    %v398 = vadd.f32 %v303, %v397
    %v399 = vpop.f32.mrf.mxu0
    %400 = vmatprep.mubr.bf16.mxu0 0
    %401 = vmatmul.mubr.bf16.gmra.mxu0 %v294
    %v402 = vpop.f32.mrf.mxu0
    %v403 = vadd.f32 %v303, %v402
    %v404 = vpop.f32.mrf.mxu0
    %v405 = vpop.f32.mrf.mxu0
    %v406 = vadd.f32 %v303, %v405
    %v407 = vpop.f32.mrf.mxu0
    %408 = vmatprep.mubr.bf16.mxu0 0
    %409 = vmatmul.mubr.bf16.gmra.mxu0 %v295
    %v410 = vpop.f32.mrf.mxu0
    %v411 = vadd.f32 %v303, %v410
    %v412 = vpop.f32.mrf.mxu0
    %v413 = vpop.f32.mrf.mxu0
    %v414 = vadd.f32 %v303, %v413
    %v415 = vpop.f32.mrf.mxu0
    %416 = vmatprep.mubr.bf16.mxu0 0
    %417 = vmatmul.mubr.bf16.gmra.mxu0 %v296
    %v418 = vpop.f32.mrf.mxu0
    %v419 = vadd.f32 %v303, %v418
    %v420 = vpop.f32.mrf.mxu0
    %v421 = vpop.f32.mrf.mxu0
    %v422 = vadd.f32 %v303, %v421
    %v423 = vpop.f32.mrf.mxu0
    %424 = vmatprep.mubr.bf16.mxu0 0
    %425 = vmatmul.mubr.bf16.gmra.mxu0 %v297
    %v426 = vpop.f32.mrf.mxu0
    %v427 = vadd.f32 %v303, %v426
    %v428 = vpop.f32.mrf.mxu0
    %v429 = vpop.f32.mrf.mxu0
    %v430 = vadd.f32 %v303, %v429
    %v431 = vpop.f32.mrf.mxu0
    %432 = vmatprep.mubr.bf16.mxu0 0
    %433 = vmatmul.mubr.bf16.gmra.mxu0 %v298
    %v434 = vpop.f32.mrf.mxu0
    %v435 = vadd.f32 %v303, %v434
    %v436 = vpop.f32.mrf.mxu0
    %v437 = vpop.f32.mrf.mxu0
    %v438 = vadd.f32 %v303, %v437
    %v439 = vpop.f32.mrf.mxu0
    %440 = vmatprep.mubr.bf16.mxu0 0
    %441 = vmatmul.mubr.bf16.gmra.mxu0 %v299
    %v442 = vpop.f32.mrf.mxu0
    %v443 = vadd.f32 %v303, %v442
    %v444 = vpop.f32.mrf.mxu0
    %v445 = vpop.f32.mrf.mxu0
    %v446 = vadd.f32 %v303, %v445
    %v447 = vpop.f32.mrf.mxu0
    %448 = vdwg.mxu0
    %v449 = vmax.f32 %v387, 0.0
    %v450 = vmax.f32 %v390, 0.0
    %v451 = vmax.f32 %v395, 0.0
    %v452 = vmax.f32 %v398, 0.0
    %v453 = vmax.f32 %v403, 0.0
    %v454 = vmax.f32 %v406, 0.0
    %v455 = vmax.f32 %v411, 0.0
    %v456 = vmax.f32 %v414, 0.0
    %v457 = vmax.f32 %v419, 0.0
    %v458 = vmax.f32 %v422, 0.0
    %v459 = vmax.f32 %v427, 0.0
    %v460 = vmax.f32 %v430, 0.0
    %v461 = vmax.f32 %v435, 0.0
    %v462 = vmax.f32 %v438, 0.0
    %v463 = vmax.f32 %v443, 0.0
    %v464 = vmax.f32 %v446, 0.0
    %v465 = vld [vmem:[#allocation7 + $0x40] sm:$0xf]
    %v466 = vld [vmem:[#allocation7 + $0x44] sm:$0xf]
    %v467 = vld [vmem:[#allocation7 + $0x48] sm:$0xf]
    %v468 = vld [vmem:[#allocation7 + $0x4c] sm:$0xf]
    %v469 = vld [vmem:[#allocation7 + $0x50] sm:$0xf]
    %v470 = vld [vmem:[#allocation7 + $0x54] sm:$0xf]
    %v471 = vld [vmem:[#allocation7 + $0x58] sm:$0xf]
    %v472 = vld [vmem:[#allocation7 + $0x5c] sm:$0xf]
    %v473 = vld [vmem:[#allocation7 + $0x60] sm:$0xf]
    %v474 = vld [vmem:[#allocation7 + $0x64] sm:$0xf]
    %v475 = vld [vmem:[#allocation7 + $0x68] sm:$0xf]
    %v476 = vld [vmem:[#allocation7 + $0x6c] sm:$0xf]
    %v477 = vld [vmem:[#allocation7 + $0x70] sm:$0xf]
    %v478 = vld [vmem:[#allocation7 + $0x74] sm:$0xf]
    %v479 = vld [vmem:[#allocation7 + $0x78] sm:$0xf]
    %v480 = vld [vmem:[#allocation7 + $0x7c] sm:$0xf]
    %v481 = vld [vmem:[#allocation8 + $0x8] sm:$0x1]
    %v482 = vpack.c.bf16 %v450, %v449
    %v483 = vpack.c.bf16 %v452, %v451
    %v484 = vpack.c.bf16 %v454, %v453
    %v485 = vpack.c.bf16 %v456, %v455
    %v486 = vpack.c.bf16 %v458, %v457
    %v487 = vpack.c.bf16 %v460, %v459
    %v488 = vpack.c.bf16 %v462, %v461
    %v489 = vpack.c.bf16 %v464, %v463
    %v490 = vlaneseq
    %v491 = vshrl.u32 %v490, 7
    %v492 = vsub.s32 0, %v491
    %v493 = vrot.slane %v481, %v492
    %v510 = vunpack.c.l.b16 %v465
    %v511 = vunpack.c.l.b16 %v466
    %v512 = vunpack.c.l.b16 %v467
    %v513 = vunpack.c.l.b16 %v468
    %v514 = vunpack.c.l.b16 %v469
    %v515 = vunpack.c.l.b16 %v470
    %v516 = vunpack.c.l.b16 %v471
    %v517 = vunpack.c.l.b16 %v472
    %v518 = vunpack.c.l.b16 %v473
    %v519 = vunpack.c.l.b16 %v474
    %v520 = vunpack.c.l.b16 %v475
    %v521 = vunpack.c.l.b16 %v476
    %v522 = vunpack.c.l.b16 %v477
    %v523 = vunpack.c.l.b16 %v478
    %v524 = vunpack.c.l.b16 %v479
    %v525 = vunpack.c.l.b16 %v480
    %v526 = vpack.c.b16 %v511, %v510
    %v527 = vpack.c.b16 %v513, %v512
    %v528 = vpack.c.b16 %v515, %v514
    %v529 = vpack.c.b16 %v517, %v516
    %v530 = vpack.c.b16 %v519, %v518
    %v531 = vpack.c.b16 %v521, %v520
    %v532 = vpack.c.b16 %v523, %v522
    %v533 = vpack.c.b16 %v525, %v524
    %542 = vmatprep.subr.bf16.mxu0 0
    %543 = vmatpush1.bf16.msra.mxu0 %v533
    %544 = vmatprep.subr.bf16.mxu0 0
    %545 = vmatpush1.bf16.msra.mxu0 %v532
    %546 = vmatprep.subr.bf16.mxu0 0
    %547 = vmatpush1.bf16.msra.mxu0 %v531
    %548 = vmatprep.subr.bf16.mxu0 0
    %549 = vmatpush1.bf16.msra.mxu0 %v530
    %550 = vmatprep.subr.bf16.mxu0 0
    %551 = vmatpush1.bf16.msra.mxu0 %v529
    %552 = vmatprep.subr.bf16.mxu0 0
    %553 = vmatpush1.bf16.msra.mxu0 %v528
    %554 = vmatprep.subr.bf16.mxu0 0
    %555 = vmatpush1.bf16.msra.mxu0 %v527
    %556 = vmatprep.subr.bf16.mxu0 0
    %557 = vmatpush1.bf16.msra.mxu0 %v526
    %558 = vmatprep.subr.bf16.mxu0 0
    %559 = vmatpush2.bf16.msra.mxu0 0
    %560 = vmatprep.subr.bf16.mxu0 0
    %561 = vmatpush2.bf16.msra.mxu0 0
    %562 = vmatprep.subr.bf16.mxu0 0
    %563 = vmatpush2.bf16.msra.mxu0 0
    %564 = vmatprep.subr.bf16.mxu0 0
    %565 = vmatpush2.bf16.msra.mxu0 0
    %566 = vmatprep.subr.bf16.mxu0 0
    %567 = vmatpush2.bf16.msra.mxu0 0
    %568 = vmatprep.subr.bf16.mxu0 0
    %569 = vmatpush2.bf16.msra.mxu0 0
    %570 = vmatprep.subr.bf16.mxu0 0
    %571 = vmatpush2.bf16.msra.mxu0 0
    %572 = vmatprep.subr.bf16.mxu0 0
    %573 = vmatpush2.bf16.msra.mxu0 0
    %574 = vmatprep.mubr.bf16.mxu0 0
    %575 = vmatmul.mubr.bf16.gmra.mxu0 %v482
    %v576 = vpop.f32.mrf.mxu0
    %v577 = vadd.f32 %v493, %v576
    %v578 = vpop.f32.mrf.mxu0
    %v579 = vpop.f32.mrf.mxu0
    %v580 = vadd.f32 %v493, %v579
    %v581 = vpop.f32.mrf.mxu0
    %582 = vmatprep.mubr.bf16.mxu0 0
    %583 = vmatmul.mubr.bf16.gmra.mxu0 %v483
    %v584 = vpop.f32.mrf.mxu0
    %v585 = vadd.f32 %v493, %v584
    %v586 = vpop.f32.mrf.mxu0
    %v587 = vpop.f32.mrf.mxu0
    %v588 = vadd.f32 %v493, %v587
    %v589 = vpop.f32.mrf.mxu0
    %590 = vmatprep.mubr.bf16.mxu0 0
    %591 = vmatmul.mubr.bf16.gmra.mxu0 %v484
    %v592 = vpop.f32.mrf.mxu0
    %v593 = vadd.f32 %v493, %v592
    %v594 = vpop.f32.mrf.mxu0
    %v595 = vpop.f32.mrf.mxu0
    %v596 = vadd.f32 %v493, %v595
    %v597 = vpop.f32.mrf.mxu0
    %598 = vmatprep.mubr.bf16.mxu0 0
    %599 = vmatmul.mubr.bf16.gmra.mxu0 %v485
    %v600 = vpop.f32.mrf.mxu0
    %v601 = vadd.f32 %v493, %v600
    %v602 = vpop.f32.mrf.mxu0
    %v603 = vpop.f32.mrf.mxu0
    %v604 = vadd.f32 %v493, %v603
    %v605 = vpop.f32.mrf.mxu0
    %606 = vmatprep.mubr.bf16.mxu0 0
    %607 = vmatmul.mubr.bf16.gmra.mxu0 %v486
    %v608 = vpop.f32.mrf.mxu0
    %v609 = vadd.f32 %v493, %v608
    %v610 = vpop.f32.mrf.mxu0
    %v611 = vpop.f32.mrf.mxu0
    %v612 = vadd.f32 %v493, %v611
    %v613 = vpop.f32.mrf.mxu0
    %614 = vmatprep.mubr.bf16.mxu0 0
    %615 = vmatmul.mubr.bf16.gmra.mxu0 %v487
    %v616 = vpop.f32.mrf.mxu0
    %v617 = vadd.f32 %v493, %v616
    %v618 = vpop.f32.mrf.mxu0
    %v619 = vpop.f32.mrf.mxu0
    %v620 = vadd.f32 %v493, %v619
    %v621 = vpop.f32.mrf.mxu0
    %622 = vmatprep.mubr.bf16.mxu0 0
    %623 = vmatmul.mubr.bf16.gmra.mxu0 %v488
    %v624 = vpop.f32.mrf.mxu0
    %v625 = vadd.f32 %v493, %v624
    %v626 = vpop.f32.mrf.mxu0
    %v627 = vpop.f32.mrf.mxu0
    %v628 = vadd.f32 %v493, %v627
    %v629 = vpop.f32.mrf.mxu0
    %630 = vmatprep.mubr.bf16.mxu0 0
    %631 = vmatmul.mubr.bf16.gmra.mxu0 %v489
    %v632 = vpop.f32.mrf.mxu0
    %v633 = vadd.f32 %v493, %v632
    %v634 = vpop.f32.mrf.mxu0
    %v635 = vpop.f32.mrf.mxu0
    %v636 = vadd.f32 %v493, %v635
    %v637 = vpop.f32.mrf.mxu0
    %638 = vdwg.mxu0
    %v639 = vmax.f32 %v577, 0.0
    %v640 = vmax.f32 %v580, 0.0
    %v641 = vmax.f32 %v585, 0.0
    %v642 = vmax.f32 %v588, 0.0
    %v643 = vmax.f32 %v593, 0.0
    %v644 = vmax.f32 %v596, 0.0
    %v645 = vmax.f32 %v601, 0.0
    %v646 = vmax.f32 %v604, 0.0
    %v647 = vmax.f32 %v609, 0.0
    %v648 = vmax.f32 %v612, 0.0
    %v649 = vmax.f32 %v617, 0.0
    %v650 = vmax.f32 %v620, 0.0
    %v651 = vmax.f32 %v625, 0.0
    %v652 = vmax.f32 %v628, 0.0
    %v653 = vmax.f32 %v633, 0.0
    %v654 = vmax.f32 %v636, 0.0
    %v655 = vpack.c.bf16 %v640, %v639
    %v656 = vpack.c.bf16 %v642, %v641
    %v657 = vpack.c.bf16 %v644, %v643
    %v658 = vpack.c.bf16 %v646, %v645
    %v659 = vpack.c.bf16 %v648, %v647
    %v660 = vpack.c.bf16 %v650, %v649
    %v661 = vpack.c.bf16 %v652, %v651
    %v662 = vpack.c.bf16 %v654, %v653
    %v663 = vmul.f32 %v639, 1.1
    %v664 = vmul.f32 %v640, 1.1
    %v665 = vmul.f32 %v641, 1.1
    %v666 = vmul.f32 %v642, 1.1
    %v667 = vmul.f32 %v643, 1.1
    %v668 = vmul.f32 %v644, 1.1
    %v669 = vmul.f32 %v645, 1.1
    %v670 = vmul.f32 %v646, 1.1
    %v671 = vmul.f32 %v647, 1.1
    %v672 = vmul.f32 %v648, 1.1
    %v673 = vmul.f32 %v649, 1.1
    %v674 = vmul.f32 %v650, 1.1
    %v675 = vmul.f32 %v651, 1.1
    %v676 = vmul.f32 %v652, 1.1
    %v677 = vmul.f32 %v653, 1.1
    %v678 = vmul.f32 %v654, 1.1
    %679 = vmatprep.subr.bf16.mxu0 0
    %680 = vmatpush1.bf16.msra.mxu0 %v662
    %681 = vmatprep.subr.bf16.mxu0 0
    %682 = vmatpush1.bf16.msra.mxu0 %v661
    %683 = vmatprep.subr.bf16.mxu0 0
    %684 = vmatpush1.bf16.msra.mxu0 %v660
    %685 = vmatprep.subr.bf16.mxu0 0
    %686 = vmatpush1.bf16.msra.mxu0 %v659
    %687 = vmatprep.subr.bf16.mxu0 0
    %688 = vmatpush1.bf16.msra.mxu0 %v658
    %689 = vmatprep.subr.bf16.mxu0 0
    %690 = vmatpush1.bf16.msra.mxu0 %v657
    %691 = vmatprep.subr.bf16.mxu0 0
    %692 = vmatpush1.bf16.msra.mxu0 %v656
    %693 = vmatprep.subr.bf16.mxu0 0
    %694 = vmatpush1.bf16.msra.mxu0 %v655
    %695 = vmatprep.subr.bf16.mxu0 0
    %696 = vmatpush2.bf16.msra.mxu0 0
    %697 = vmatprep.subr.bf16.mxu0 0
    %698 = vmatpush2.bf16.msra.mxu0 0
    %699 = vmatprep.subr.bf16.mxu0 0
    %700 = vmatpush2.bf16.msra.mxu0 0
    %701 = vmatprep.subr.bf16.mxu0 0
    %702 = vmatpush2.bf16.msra.mxu0 0
    %703 = vmatprep.subr.bf16.mxu0 0
    %704 = vmatpush2.bf16.msra.mxu0 0
    %705 = vmatprep.subr.bf16.mxu0 0
    %706 = vmatpush2.bf16.msra.mxu0 0
    %707 = vmatprep.subr.bf16.mxu0 0
    %708 = vmatpush2.bf16.msra.mxu0 0
    %709 = vmatprep.subr.bf16.mxu0 0
    %710 = vmatpush2.bf16.msra.mxu0 0
    %711 = vmatprep.mubr.bf16.mxu0 0
    %712 = vmatmul.mubr.bf16.gmra.mxu0 %v162
    %v713 = vpop.f32.mrf.mxu0
    %v714 = vadd.f32 %v663, %v713
    %v715 = vpop.f32.mrf.mxu0
    %v716 = vpop.f32.mrf.mxu0
    %v717 = vadd.f32 %v664, %v716
    %v718 = vpop.f32.mrf.mxu0
    %719 = vmatprep.mubr.bf16.mxu0 0
    %720 = vmatmul.mubr.bf16.gmra.mxu0 %v163
    %v721 = vpop.f32.mrf.mxu0
    %v722 = vadd.f32 %v665, %v721
    %v723 = vpop.f32.mrf.mxu0
    %v724 = vpop.f32.mrf.mxu0
    %v725 = vadd.f32 %v666, %v724
    %v726 = vpop.f32.mrf.mxu0
    %727 = vmatprep.mubr.bf16.mxu0 0
    %728 = vmatmul.mubr.bf16.gmra.mxu0 %v164
    %v729 = vpop.f32.mrf.mxu0
    %v730 = vadd.f32 %v667, %v729
    %v731 = vpop.f32.mrf.mxu0
    %v732 = vpop.f32.mrf.mxu0
    %v733 = vadd.f32 %v668, %v732
    %v734 = vpop.f32.mrf.mxu0
    %735 = vmatprep.mubr.bf16.mxu0 0
    %736 = vmatmul.mubr.bf16.gmra.mxu0 %v165
    %v737 = vpop.f32.mrf.mxu0
    %v738 = vadd.f32 %v669, %v737
    %v739 = vpop.f32.mrf.mxu0
    %v740 = vpop.f32.mrf.mxu0
    %v741 = vadd.f32 %v670, %v740
    %v742 = vpop.f32.mrf.mxu0
    %743 = vmatprep.mubr.bf16.mxu0 0
    %744 = vmatmul.mubr.bf16.gmra.mxu0 %v166
    %v745 = vpop.f32.mrf.mxu0
    %v746 = vadd.f32 %v671, %v745
    %v747 = vpop.f32.mrf.mxu0
    %v748 = vpop.f32.mrf.mxu0
    %v749 = vadd.f32 %v672, %v748
    %v750 = vpop.f32.mrf.mxu0
    %751 = vmatprep.mubr.bf16.mxu0 0
    %752 = vmatmul.mubr.bf16.gmra.mxu0 %v167
    %v753 = vpop.f32.mrf.mxu0
    %v754 = vadd.f32 %v673, %v753
    %v755 = vpop.f32.mrf.mxu0
    %v756 = vpop.f32.mrf.mxu0
    %v757 = vadd.f32 %v674, %v756
    %v758 = vpop.f32.mrf.mxu0
    %759 = vmatprep.mubr.bf16.mxu0 0
    %760 = vmatmul.mubr.bf16.gmra.mxu0 %v168
    %v761 = vpop.f32.mrf.mxu0
    %v762 = vadd.f32 %v675, %v761
    %v763 = vpop.f32.mrf.mxu0
    %v764 = vpop.f32.mrf.mxu0
    %v765 = vadd.f32 %v676, %v764
    %v766 = vpop.f32.mrf.mxu0
    %767 = vmatprep.mubr.bf16.mxu0 0
    %768 = vmatmul.mubr.bf16.gmra.mxu0 %v169
    %v769 = vpop.f32.mrf.mxu0
    %v770 = vadd.f32 %v677, %v769
    %v771 = vpop.f32.mrf.mxu0
    %v772 = vpop.f32.mrf.mxu0
    %v773 = vadd.f32 %v678, %v772
    %v774 = vpop.f32.mrf.mxu0
    %775 = vdwg.mxu0
    %s776 = scalar_lea.vmem [#allocation7], 128
    %v777 = vld [vmem:[%s776] sm:$0xf]
    %v778 = vld [vmem:[%s776 + $0x4] sm:$0xf]
    %v779 = vld [vmem:[%s776 + $0x8] sm:$0xf]
    %v780 = vld [vmem:[%s776 + $0xc] sm:$0xf]
    %v781 = vld [vmem:[%s776 + $0x10] sm:$0xf]
    %v782 = vld [vmem:[%s776 + $0x14] sm:$0xf]
    %v783 = vld [vmem:[%s776 + $0x18] sm:$0xf]
    %v784 = vld [vmem:[%s776 + $0x1c] sm:$0xf]
    %v785 = vld [vmem:[%s776 + $0x20] sm:$0xf]
    %v786 = vld [vmem:[%s776 + $0x24] sm:$0xf]
    %v787 = vld [vmem:[%s776 + $0x28] sm:$0xf]
    %v788 = vld [vmem:[%s776 + $0x2c] sm:$0xf]
    %v789 = vld [vmem:[%s776 + $0x30] sm:$0xf]
    %v790 = vld [vmem:[%s776 + $0x34] sm:$0xf]
    %v791 = vld [vmem:[%s776 + $0x38] sm:$0xf]
    %v792 = vld [vmem:[%s776 + $0x3c] sm:$0xf]
    %s793 = scalar_lea.vmem [#allocation8], 16
    %v794 = vld [vmem:[%s793] sm:$0x1]
    %v795 = vpack.c.bf16 %v717, %v714
    %v796 = vpack.c.bf16 %v725, %v722
    %v797 = vpack.c.bf16 %v733, %v730
    %v798 = vpack.c.bf16 %v741, %v738
    %v799 = vpack.c.bf16 %v749, %v746
    %v800 = vpack.c.bf16 %v757, %v754
    %v801 = vpack.c.bf16 %v765, %v762
    %v802 = vpack.c.bf16 %v773, %v770
    %v803 = vlaneseq
    %v804 = vshrl.u32 %v803, 7
    %v805 = vsub.s32 0, %v804
    %v806 = vrot.slane %v794, %v805
    %v823 = vunpack.c.l.b16 %v777
    %v824 = vunpack.c.l.b16 %v778
    %v825 = vunpack.c.l.b16 %v779
    %v826 = vunpack.c.l.b16 %v780
    %v827 = vunpack.c.l.b16 %v781
    %v828 = vunpack.c.l.b16 %v782
    %v829 = vunpack.c.l.b16 %v783
    %v830 = vunpack.c.l.b16 %v784
    %v831 = vunpack.c.l.b16 %v785
    %v832 = vunpack.c.l.b16 %v786
    %v833 = vunpack.c.l.b16 %v787
    %v834 = vunpack.c.l.b16 %v788
    %v835 = vunpack.c.l.b16 %v789
    %v836 = vunpack.c.l.b16 %v790
    %v837 = vunpack.c.l.b16 %v791
    %v838 = vunpack.c.l.b16 %v792
    %v839 = vpack.c.b16 %v824, %v823
    %v840 = vpack.c.b16 %v826, %v825
    %v841 = vpack.c.b16 %v828, %v827
    %v842 = vpack.c.b16 %v830, %v829
    %v843 = vpack.c.b16 %v832, %v831
    %v844 = vpack.c.b16 %v834, %v833
    %v845 = vpack.c.b16 %v836, %v835
    %v846 = vpack.c.b16 %v838, %v837
    %855 = vmatprep.subr.bf16.mxu0 0
    %856 = vmatpush1.bf16.msra.mxu0 %v846
    %857 = vmatprep.subr.bf16.mxu0 0
    %858 = vmatpush1.bf16.msra.mxu0 %v845
    %859 = vmatprep.subr.bf16.mxu0 0
    %860 = vmatpush1.bf16.msra.mxu0 %v844
    %861 = vmatprep.subr.bf16.mxu0 0
    %862 = vmatpush1.bf16.msra.mxu0 %v843
    %863 = vmatprep.subr.bf16.mxu0 0
    %864 = vmatpush1.bf16.msra.mxu0 %v842
    %865 = vmatprep.subr.bf16.mxu0 0
    %866 = vmatpush1.bf16.msra.mxu0 %v841
    %867 = vmatprep.subr.bf16.mxu0 0
    %868 = vmatpush1.bf16.msra.mxu0 %v840
    %869 = vmatprep.subr.bf16.mxu0 0
    %870 = vmatpush1.bf16.msra.mxu0 %v839
    %871 = vmatprep.subr.bf16.mxu0 0
    %872 = vmatpush2.bf16.msra.mxu0 0
    %873 = vmatprep.subr.bf16.mxu0 0
    %874 = vmatpush2.bf16.msra.mxu0 0
    %875 = vmatprep.subr.bf16.mxu0 0
    %876 = vmatpush2.bf16.msra.mxu0 0
    %877 = vmatprep.subr.bf16.mxu0 0
    %878 = vmatpush2.bf16.msra.mxu0 0
    %879 = vmatprep.subr.bf16.mxu0 0
    %880 = vmatpush2.bf16.msra.mxu0 0
    %881 = vmatprep.subr.bf16.mxu0 0
    %882 = vmatpush2.bf16.msra.mxu0 0
    %883 = vmatprep.subr.bf16.mxu0 0
    %884 = vmatpush2.bf16.msra.mxu0 0
    %885 = vmatprep.subr.bf16.mxu0 0
    %886 = vmatpush2.bf16.msra.mxu0 0
    %887 = vmatprep.mubr.bf16.mxu0 0
    %888 = vmatmul.mubr.bf16.gmra.mxu0 %v795
    %v889 = vpop.f32.mrf.mxu0
    %v890 = vadd.f32 %v806, %v889
    %v891 = vpop.f32.mrf.mxu0
    %v892 = vpop.f32.mrf.mxu0
    %v893 = vadd.f32 %v806, %v892
    %v894 = vpop.f32.mrf.mxu0
    %895 = vmatprep.mubr.bf16.mxu0 0
    %896 = vmatmul.mubr.bf16.gmra.mxu0 %v796
    %v897 = vpop.f32.mrf.mxu0
    %v898 = vadd.f32 %v806, %v897
    %v899 = vpop.f32.mrf.mxu0
    %v900 = vpop.f32.mrf.mxu0
    %v901 = vadd.f32 %v806, %v900
    %v902 = vpop.f32.mrf.mxu0
    %903 = vmatprep.mubr.bf16.mxu0 0
    %904 = vmatmul.mubr.bf16.gmra.mxu0 %v797
    %v905 = vpop.f32.mrf.mxu0
    %v906 = vadd.f32 %v806, %v905
    %v907 = vpop.f32.mrf.mxu0
    %v908 = vpop.f32.mrf.mxu0
    %v909 = vadd.f32 %v806, %v908
    %v910 = vpop.f32.mrf.mxu0
    %911 = vmatprep.mubr.bf16.mxu0 0
    %912 = vmatmul.mubr.bf16.gmra.mxu0 %v798
    %v913 = vpop.f32.mrf.mxu0
    %v914 = vadd.f32 %v806, %v913
    %v915 = vpop.f32.mrf.mxu0
    %v916 = vpop.f32.mrf.mxu0
    %v917 = vadd.f32 %v806, %v916
    %v918 = vpop.f32.mrf.mxu0
    %919 = vmatprep.mubr.bf16.mxu0 0
    %920 = vmatmul.mubr.bf16.gmra.mxu0 %v799
    %v921 = vpop.f32.mrf.mxu0
    %v922 = vadd.f32 %v806, %v921
    %v923 = vpop.f32.mrf.mxu0
    %v924 = vpop.f32.mrf.mxu0
    %v925 = vadd.f32 %v806, %v924
    %v926 = vpop.f32.mrf.mxu0
    %927 = vmatprep.mubr.bf16.mxu0 0
    %928 = vmatmul.mubr.bf16.gmra.mxu0 %v800
    %v929 = vpop.f32.mrf.mxu0
    %v930 = vadd.f32 %v806, %v929
    %v931 = vpop.f32.mrf.mxu0
    %v932 = vpop.f32.mrf.mxu0
    %v933 = vadd.f32 %v806, %v932
    %v934 = vpop.f32.mrf.mxu0
    %935 = vmatprep.mubr.bf16.mxu0 0
    %936 = vmatmul.mubr.bf16.gmra.mxu0 %v801
    %v937 = vpop.f32.mrf.mxu0
    %v938 = vadd.f32 %v806, %v937
    %v939 = vpop.f32.mrf.mxu0
    %v940 = vpop.f32.mrf.mxu0
    %v941 = vadd.f32 %v806, %v940
    %v942 = vpop.f32.mrf.mxu0
    %943 = vmatprep.mubr.bf16.mxu0 0
    %944 = vmatmul.mubr.bf16.gmra.mxu0 %v802
    %v945 = vpop.f32.mrf.mxu0
    %v946 = vadd.f32 %v806, %v945
    %v947 = vpop.f32.mrf.mxu0
    %v948 = vpop.f32.mrf.mxu0
    %v949 = vadd.f32 %v806, %v948
    %v950 = vpop.f32.mrf.mxu0
    %951 = vdwg.mxu0
    %v952 = vmax.f32 %v890, 0.0
    %v953 = vmax.f32 %v893, 0.0
    %v954 = vmax.f32 %v898, 0.0
    %v955 = vmax.f32 %v901, 0.0
    %v956 = vmax.f32 %v906, 0.0
    %v957 = vmax.f32 %v909, 0.0
    %v958 = vmax.f32 %v914, 0.0
    %v959 = vmax.f32 %v917, 0.0
    %v960 = vmax.f32 %v922, 0.0
    %v961 = vmax.f32 %v925, 0.0
    %v962 = vmax.f32 %v930, 0.0
    %v963 = vmax.f32 %v933, 0.0
    %v964 = vmax.f32 %v938, 0.0
    %v965 = vmax.f32 %v941, 0.0
    %v966 = vmax.f32 %v946, 0.0
    %v967 = vmax.f32 %v949, 0.0
    %v968 = vld [vmem:[%s776 + $0x40] sm:$0xf]
    %v969 = vld [vmem:[%s776 + $0x44] sm:$0xf]
    %v970 = vld [vmem:[%s776 + $0x48] sm:$0xf]
    %v971 = vld [vmem:[%s776 + $0x4c] sm:$0xf]
    %v972 = vld [vmem:[%s776 + $0x50] sm:$0xf]
    %v973 = vld [vmem:[%s776 + $0x54] sm:$0xf]
    %v974 = vld [vmem:[%s776 + $0x58] sm:$0xf]
    %v975 = vld [vmem:[%s776 + $0x5c] sm:$0xf]
    %v976 = vld [vmem:[%s776 + $0x60] sm:$0xf]
    %v977 = vld [vmem:[%s776 + $0x64] sm:$0xf]
    %v978 = vld [vmem:[%s776 + $0x68] sm:$0xf]
    %v979 = vld [vmem:[%s776 + $0x6c] sm:$0xf]
    %v980 = vld [vmem:[%s776 + $0x70] sm:$0xf]
    %v981 = vld [vmem:[%s776 + $0x74] sm:$0xf]
    %v982 = vld [vmem:[%s776 + $0x78] sm:$0xf]
    %v983 = vld [vmem:[%s776 + $0x7c] sm:$0xf]
    %v984 = vld [vmem:[%s793 + $0x8] sm:$0x1]
    %v985 = vpack.c.bf16 %v953, %v952
    %v986 = vpack.c.bf16 %v955, %v954
    %v987 = vpack.c.bf16 %v957, %v956
    %v988 = vpack.c.bf16 %v959, %v958
    %v989 = vpack.c.bf16 %v961, %v960
    %v990 = vpack.c.bf16 %v963, %v962
    %v991 = vpack.c.bf16 %v965, %v964
    %v992 = vpack.c.bf16 %v967, %v966
    %v993 = vlaneseq
    %v994 = vshrl.u32 %v993, 7
    %v995 = vsub.s32 0, %v994
    %v996 = vrot.slane %v984, %v995
    %v1013 = vunpack.c.l.b16 %v968
    %v1014 = vunpack.c.l.b16 %v969
    %v1015 = vunpack.c.l.b16 %v970
    %v1016 = vunpack.c.l.b16 %v971
    %v1017 = vunpack.c.l.b16 %v972
    %v1018 = vunpack.c.l.b16 %v973
    %v1019 = vunpack.c.l.b16 %v974
    %v1020 = vunpack.c.l.b16 %v975
    %v1021 = vunpack.c.l.b16 %v976
    %v1022 = vunpack.c.l.b16 %v977
    %v1023 = vunpack.c.l.b16 %v978
    %v1024 = vunpack.c.l.b16 %v979
    %v1025 = vunpack.c.l.b16 %v980
    %v1026 = vunpack.c.l.b16 %v981
    %v1027 = vunpack.c.l.b16 %v982
    %v1028 = vunpack.c.l.b16 %v983
    %v1029 = vpack.c.b16 %v1014, %v1013
    %v1030 = vpack.c.b16 %v1016, %v1015
    %v1031 = vpack.c.b16 %v1018, %v1017
    %v1032 = vpack.c.b16 %v1020, %v1019
    %v1033 = vpack.c.b16 %v1022, %v1021
    %v1034 = vpack.c.b16 %v1024, %v1023
    %v1035 = vpack.c.b16 %v1026, %v1025
    %v1036 = vpack.c.b16 %v1028, %v1027
    %1045 = vmatprep.subr.bf16.mxu0 0
    %1046 = vmatpush1.bf16.msra.mxu0 %v1036
    %1047 = vmatprep.subr.bf16.mxu0 0
    %1048 = vmatpush1.bf16.msra.mxu0 %v1035
    %1049 = vmatprep.subr.bf16.mxu0 0
    %1050 = vmatpush1.bf16.msra.mxu0 %v1034
    %1051 = vmatprep.subr.bf16.mxu0 0
    %1052 = vmatpush1.bf16.msra.mxu0 %v1033
    %1053 = vmatprep.subr.bf16.mxu0 0
    %1054 = vmatpush1.bf16.msra.mxu0 %v1032
    %1055 = vmatprep.subr.bf16.mxu0 0
    %1056 = vmatpush1.bf16.msra.mxu0 %v1031
    %1057 = vmatprep.subr.bf16.mxu0 0
    %1058 = vmatpush1.bf16.msra.mxu0 %v1030
    %1059 = vmatprep.subr.bf16.mxu0 0
    %1060 = vmatpush1.bf16.msra.mxu0 %v1029
    %1061 = vmatprep.subr.bf16.mxu0 0
    %1062 = vmatpush2.bf16.msra.mxu0 0
    %1063 = vmatprep.subr.bf16.mxu0 0
    %1064 = vmatpush2.bf16.msra.mxu0 0
    %1065 = vmatprep.subr.bf16.mxu0 0
    %1066 = vmatpush2.bf16.msra.mxu0 0
    %1067 = vmatprep.subr.bf16.mxu0 0
    %1068 = vmatpush2.bf16.msra.mxu0 0
    %1069 = vmatprep.subr.bf16.mxu0 0
    %1070 = vmatpush2.bf16.msra.mxu0 0
    %1071 = vmatprep.subr.bf16.mxu0 0
    %1072 = vmatpush2.bf16.msra.mxu0 0
    %1073 = vmatprep.subr.bf16.mxu0 0
    %1074 = vmatpush2.bf16.msra.mxu0 0
    %1075 = vmatprep.subr.bf16.mxu0 0
    %1076 = vmatpush2.bf16.msra.mxu0 0
    %1077 = vmatprep.mubr.bf16.mxu0 0
    %1078 = vmatmul.mubr.bf16.gmra.mxu0 %v985
    %v1079 = vpop.f32.mrf.mxu0
    %v1080 = vadd.f32 %v996, %v1079
    %v1081 = vpop.f32.mrf.mxu0
    %v1082 = vpop.f32.mrf.mxu0
    %v1083 = vadd.f32 %v996, %v1082
    %v1084 = vpop.f32.mrf.mxu0
    %1085 = vmatprep.mubr.bf16.mxu0 0
    %1086 = vmatmul.mubr.bf16.gmra.mxu0 %v986
    %v1087 = vpop.f32.mrf.mxu0
    %v1088 = vadd.f32 %v996, %v1087
    %v1089 = vpop.f32.mrf.mxu0
    %v1090 = vpop.f32.mrf.mxu0
    %v1091 = vadd.f32 %v996, %v1090
    %v1092 = vpop.f32.mrf.mxu0
    %1093 = vmatprep.mubr.bf16.mxu0 0
    %1094 = vmatmul.mubr.bf16.gmra.mxu0 %v987
    %v1095 = vpop.f32.mrf.mxu0
    %v1096 = vadd.f32 %v996, %v1095
    %v1097 = vpop.f32.mrf.mxu0
    %v1098 = vpop.f32.mrf.mxu0
    %v1099 = vadd.f32 %v996, %v1098
    %v1100 = vpop.f32.mrf.mxu0
    %1101 = vmatprep.mubr.bf16.mxu0 0
    %1102 = vmatmul.mubr.bf16.gmra.mxu0 %v988
    %v1103 = vpop.f32.mrf.mxu0
    %v1104 = vadd.f32 %v996, %v1103
    %v1105 = vpop.f32.mrf.mxu0
    %v1106 = vpop.f32.mrf.mxu0
    %v1107 = vadd.f32 %v996, %v1106
    %v1108 = vpop.f32.mrf.mxu0
    %1109 = vmatprep.mubr.bf16.mxu0 0
    %1110 = vmatmul.mubr.bf16.gmra.mxu0 %v989
    %v1111 = vpop.f32.mrf.mxu0
    %v1112 = vadd.f32 %v996, %v1111
    %v1113 = vpop.f32.mrf.mxu0
    %v1114 = vpop.f32.mrf.mxu0
    %v1115 = vadd.f32 %v996, %v1114
    %v1116 = vpop.f32.mrf.mxu0
    %1117 = vmatprep.mubr.bf16.mxu0 0
    %1118 = vmatmul.mubr.bf16.gmra.mxu0 %v990
    %v1119 = vpop.f32.mrf.mxu0
    %v1120 = vadd.f32 %v996, %v1119
    %v1121 = vpop.f32.mrf.mxu0
    %v1122 = vpop.f32.mrf.mxu0
    %v1123 = vadd.f32 %v996, %v1122
    %v1124 = vpop.f32.mrf.mxu0
    %1125 = vmatprep.mubr.bf16.mxu0 0
    %1126 = vmatmul.mubr.bf16.gmra.mxu0 %v991
    %v1127 = vpop.f32.mrf.mxu0
    %v1128 = vadd.f32 %v996, %v1127
    %v1129 = vpop.f32.mrf.mxu0
    %v1130 = vpop.f32.mrf.mxu0
    %v1131 = vadd.f32 %v996, %v1130
    %v1132 = vpop.f32.mrf.mxu0
    %1133 = vmatprep.mubr.bf16.mxu0 0
    %1134 = vmatmul.mubr.bf16.gmra.mxu0 %v992
    %v1135 = vpop.f32.mrf.mxu0
    %v1136 = vadd.f32 %v996, %v1135
    %v1137 = vpop.f32.mrf.mxu0
    %v1138 = vpop.f32.mrf.mxu0
    %v1139 = vadd.f32 %v996, %v1138
    %v1140 = vpop.f32.mrf.mxu0
    %1141 = vdwg.mxu0
    %v1142 = vmax.f32 %v1080, 0.0
    %v1143 = vmax.f32 %v1083, 0.0
    %v1144 = vmax.f32 %v1088, 0.0
    %v1145 = vmax.f32 %v1091, 0.0
    %v1146 = vmax.f32 %v1096, 0.0
    %v1147 = vmax.f32 %v1099, 0.0
    %v1148 = vmax.f32 %v1104, 0.0
    %v1149 = vmax.f32 %v1107, 0.0
    %v1150 = vmax.f32 %v1112, 0.0
    %v1151 = vmax.f32 %v1115, 0.0
    %v1152 = vmax.f32 %v1120, 0.0
    %v1153 = vmax.f32 %v1123, 0.0
    %v1154 = vmax.f32 %v1128, 0.0
    %v1155 = vmax.f32 %v1131, 0.0
    %v1156 = vmax.f32 %v1136, 0.0
    %v1157 = vmax.f32 %v1139, 0.0
    %1158 = vst [vmem:[#allocation10] sm:$0xff] %v1142
    %1159 = vst [vmem:[#allocation10 + $0x8] sm:$0xff] %v1143
    %1160 = vst [vmem:[#allocation10 + $0x10] sm:$0xff] %v1144
    %1161 = vst [vmem:[#allocation10 + $0x18] sm:$0xff] %v1145
    %1162 = vst [vmem:[#allocation10 + $0x20] sm:$0xff] %v1146
    %1163 = vst [vmem:[#allocation10 + $0x28] sm:$0xff] %v1147
    %1164 = vst [vmem:[#allocation10 + $0x30] sm:$0xff] %v1148
    %1165 = vst [vmem:[#allocation10 + $0x38] sm:$0xff] %v1149
    %1166 = vst [vmem:[#allocation10 + $0x40] sm:$0xff] %v1150
    %1167 = vst [vmem:[#allocation10 + $0x48] sm:$0xff] %v1151
    %1168 = vst [vmem:[#allocation10 + $0x50] sm:$0xff] %v1152
    %1169 = vst [vmem:[#allocation10 + $0x58] sm:$0xff] %v1153
    %1170 = vst [vmem:[#allocation10 + $0x60] sm:$0xff] %v1154
    %1171 = vst [vmem:[#allocation10 + $0x68] sm:$0xff] %v1155
    %1172 = vst [vmem:[#allocation10 + $0x70] sm:$0xff] %v1156
    %1173 = vst [vmem:[#allocation10 + $0x78] sm:$0xff] %v1157
    // Predicated region
    $region34: #{tpu_custom_call.1} parent=1 // pred_check
      _
    $region35: #{tpu_custom_call.1} parent=1 // pred_check_branch
      %1175 = sbr.rel (0) target = $region37
    $region36: #{tpu_custom_call.1} parent=1 // pred_region
      %s1177 = ssub.s32 2048, 2048
      %1178 = vsyncadd [#allocation4], %s1177
      %s1179 = sshll.u32 [#allocation10], 4
      %s1180 = int_to_ptr.vmem [resolvable:$true] %s1179
      %1185 = dma.vmem_to_hbm [thread:$0]  %s1180, 2048, %s4, [#allocation4], 128, 128, 8
    $region37: #{tpu_custom_call.1} parent=1 // pred_fallthru
      _
    // Predicated region
    $region38: #{tpu_custom_call.1} parent=1 // pred_check
      _
    $region39: #{tpu_custom_call.1} parent=1 // pred_check_branch
      %1187 = sbr.rel (0) target = $region41
    $region40: #{tpu_custom_call.1} parent=1 // pred_region
      %1188 = dma.done [#allocation4], 2048
    $region41: #{tpu_custom_call.1} parent=1 // pred_fallthru
      _
    %1189 = vsyncpa [#allocation3], 1
    %1190 = vsyncpa [#allocation6], 1
    %1191 = vsyncpa [#allocation9], 1
    %1192 = vsyncpa [#allocation4], 1

</llo_original>
